<compile_context>
chip_gen: v7x
topology: tpu7x:2x2x1
jax: 0.10.0
libtpu: 0.0.40
codegen_flags: <defaults>
</compile_context>

<pallas_src>
import functools

import jax
import jax.numpy as jnp
from jax.experimental import pallas as pl
from jax.experimental.pallas import tpu as pltpu

LANE = 128      # lane width (last-dim alignment for the *output* tile)
SUBLANE = 8     # sublane width (second-to-last dim alignment)


def _round_up(x, m):
    return ((x + m - 1) // m) * m


def simplenet_kernel(x_ref, w1_ref, b1_ref, w2_ref, b2_ref, out_ref):
    # Cast the activation tile to bf16 in-kernel (VPU work hidden under the
    # MXU) instead of a separate HBM pad/cast pass in the wrapper.
    x = x_ref[...].astype(jnp.bfloat16)
    # fc1 on the MXU: bf16 operands, f32 accumulation.
    h = jnp.dot(x, w1_ref[...], preferred_element_type=jnp.float32)
    # Bias-add + ReLU in f32 on the VPU (full-rate on all generations, incl. v5e).
    h = jnp.maximum(h + b1_ref[...], 0.0)
    # fc2 on the MXU: cast the hidden tile back to bf16.
    o = jnp.dot(h.astype(jnp.bfloat16), w2_ref[...],
                preferred_element_type=jnp.float32)
    out_ref[...] = (o + b2_ref[...]).astype(out_ref.dtype)


def prepare_params(w1, b1, w2, b2, *, compute_dtype=jnp.bfloat16,
                   input_size=None, hidden_size=None, num_classes=None):
    """One-time parameter prep (outside the per-call hot path).

    Weights must be (in, out), i.e. the transpose of torch's (out, in) layout.
    Only the *class* (output) dim is padded to a lane multiple; the reduction
    dims (input_size, hidden) are NOT padded -- they cost HBM bytes and Mosaic
    handles their VMEM layout internally.
    """
    I, H = w1.shape
    H2, C = w2.shape
    assert H == H2, "w1/w2 hidden dims disagree -- weights must be (in, out)"
    # Orientation sanity checks (catches raw torch (out, in) weights).
    if input_size is not None:
        assert I == input_size, f"w1 must be (input_size, hidden); got {w1.shape}"
    if hidden_size is not None:
        assert H == hidden_size, f"hidden dim mismatch: {H} vs {hidden_size}"
    if num_classes is not None:
        assert C == num_classes, f"w2 must be (hidden, num_classes); got {w2.shape}"

    C_p = _round_up(C, LANE)   # lane-dense output dim (unmasked vst)

    w1_p = w1.astype(compute_dtype)
    w2_p = jnp.zeros((H, C_p), compute_dtype).at[:, :C].set(w2.astype(compute_dtype))
    # Biases stay f32 (bias-add/ReLU run in f32), pre-shaped to (1, N).
    b1_p = b1.astype(jnp.float32).reshape(1, H)
    b2_p = jnp.zeros((1, C_p), jnp.float32).at[0, :C].set(b2.astype(jnp.float32))
    return w1_p, b1_p, w2_p, b2_p


def _choose_tile_b(B, requested):
    """Pick the batch tile: big tiles to amortize per-step overhead, but >=2
    grid steps when the batch is large enough (v7x dual-TensorCore)."""
    if requested is None:
        requested = 1024 if B >= 8192 else 512
    tb = B if B <= requested else requested          # single exact tile if it fits
    if B >= 512 and pl.cdiv(B, tb) < 2:              # enough rows for two >=256 tiles
        tb = _round_up(pl.cdiv(B, 2), SUBLANE)
    return tb


def _vmem_budget_bytes(tb, I, H, C_p):
    """Honest scoped-VMEM request: resident weights (default double-buffered),
    double-buffered x/out tiles, intermediates, 2x headroom."""
    f32, bf16 = 4, 2
    weights = 2 * (I * H + H * C_p) * bf16
    biases = 2 * (H + C_p) * f32
    x_tiles = 2 * tb * I * f32
    out_tiles = 2 * tb * C_p * f32
    interm = tb * (H + C_p) * f32 + tb * (I + H) * bf16
    need = weights + biases + x_tiles + out_tiles + interm
    return int(min(112 * 2**20, max(4 * 2**20, 2 * need)))


@functools.partial(jax.jit, static_argnames=("num_classes", "tile_b"))
def simplenet_forward(x, w1_p, b1_p, w2_p, b2_p, *, num_classes, tile_b=None):
    """x: (B, input_size) f32 (or bf16).  Params from prepare_params().
    Returns (B, num_classes) f32."""
    B, I = x.shape
    I_w, H = w1_p.shape
    assert I == I_w, f"x feature dim {I} != w1 input dim {I_w}"
    C_p = w2_p.shape[1]

    tb = _choose_tile_b(B, tile_b)
    grid = (pl.cdiv(B, tb),)   # ragged tail: last block partial, writes masked

    out_p = pl.pallas_call(
        simplenet_kernel,
        out_shape=jax.ShapeDtypeStruct((B, C_p), jnp.float32),
        grid=grid,
        in_specs=[
            # Activations: tiled over the batch grid axis, real (unpadded) I.
            pl.BlockSpec((tb, I), lambda i: (i, 0)),
            # Weights / biases: constant index_map -> fetched once, VMEM-resident.
            pl.BlockSpec((I_w, H), lambda i: (0, 0)),
            pl.BlockSpec((1, H), lambda i: (0, 0)),
            pl.BlockSpec((H, C_p), lambda i: (0, 0)),
            pl.BlockSpec((1, C_p), lambda i: (0, 0)),
        ],
        out_specs=pl.BlockSpec((tb, C_p), lambda i: (i, 0)),
        compiler_params=pltpu.CompilerParams(
            dimension_semantics=("parallel",),      # megacore / v7x dual-TC
            vmem_limit_bytes=_vmem_budget_bytes(tb, I, H, C_p),
        ),
    )(x, w1_p, b1_p, w2_p, b2_p)

    # Slice away class padding outside the kernel (kernel output stays lane-dense).
    return out_p[:, :num_classes]


def init_params(key, input_size, hidden_size, num_classes):
    """torch.nn.Linear-style init (uniform(+/- 1/sqrt(fan_in))), stored (in, out)."""
    k1, k2, k3, k4 = jax.random.split(key, 4)
    lim1 = 1.0 / jnp.sqrt(jnp.float32(input_size))
    lim2 = 1.0 / jnp.sqrt(jnp.float32(hidden_size))
    w1 = jax.random.uniform(k1, (input_size, hidden_size), jnp.float32, -lim1, lim1)
    b1 = jax.random.uniform(k2, (hidden_size,), jnp.float32, -lim1, lim1)
    w2 = jax.random.uniform(k3, (hidden_size, num_classes), jnp.float32, -lim2, lim2)
    b2 = jax.random.uniform(k4, (num_classes,), jnp.float32, -lim2, lim2)
    return w1, b1, w2, b2


def _reference(x, w1, b1, w2, b2):
    return jnp.maximum(x @ w1 + b1, 0.0) @ w2 + b2


def _reference_bf16(x, w1, b1, w2, b2):
    # Mirrors the kernel numerics: bf16 operands, f32 accumulate.
    xb = x.astype(jnp.bfloat16).astype(jnp.float32)
    w1b = w1.astype(jnp.bfloat16).astype(jnp.float32)
    w2b = w2.astype(jnp.bfloat16).astype(jnp.float32)
    hb = jnp.maximum(xb @ w1b + b1, 0.0)
    return hb.astype(jnp.bfloat16).astype(jnp.float32) @ w2b + b2


if __name__ == "__main__":
    # Small shapes consistent with SimpleNet(input_size, hidden_size, num_classes).
    batch, input_size, hidden_size, num_classes = 8, 32, 64, 16

    key = jax.random.PRNGKey(0)
    kx, kp, kx2 = jax.random.split(key, 3)
    x = jax.random.normal(kx, (batch, input_size), jnp.float32)
    w1, b1, w2, b2 = init_params(kp, input_size, hidden_size, num_classes)

    # One-time parameter prep (lane-dense class dim + bf16 weight cast only).
    w1_p, b1_p, w2_p, b2_p = prepare_params(
        w1, b1, w2, b2,
        input_size=input_size, hidden_size=hidden_size, num_classes=num_classes)

    out = simplenet_forward(x, w1_p, b1_p, w2_p, b2_p, num_classes=num_classes)
    out = jax.block_until_ready(out)
    assert out.shape == (batch, num_classes)

    ref_f32 = _reference(x, w1, b1, w2, b2)
    assert jnp.allclose(out, ref_f32, atol=5e-2, rtol=5e-2), (
        jnp.max(jnp.abs(out - ref_f32)))
    ref_b16 = _reference_bf16(x, w1, b1, w2, b2)
    assert jnp.allclose(out, ref_b16, atol=1e-3, rtol=1e-3), (
        jnp.max(jnp.abs(out - ref_b16)))

    # Exercise the multi-tile grid + ragged batch tail (grid=3, last tile partial).
    batch2 = 40
    x2 = jax.random.normal(kx2, (batch2, input_size), jnp.float32)
    out2 = simplenet_forward(x2, w1_p, b1_p, w2_p, b2_p,
                             num_classes=num_classes, tile_b=16)
    out2 = jax.block_until_ready(out2)
    assert out2.shape == (batch2, num_classes)
    ref2 = _reference_bf16(x2, w1, b1, w2, b2)
    assert jnp.allclose(out2, ref2, atol=1e-3, rtol=1e-3), (
        jnp.max(jnp.abs(out2 - ref2)))

    print("KERNEL_OK")
</pallas_src>

<mosaic_0001>
module attributes {stable_mosaic.version = 11 : i64} {
  func.func @simplenet_kernel(%arg0: i32, %arg1: memref<8x32xf32, #tpu.memory_space<vmem>>, %arg2: memref<32x64xbf16, #tpu.memory_space<vmem>>, %arg3: memref<1x64xf32, #tpu.memory_space<vmem>>, %arg4: memref<64x128xbf16, #tpu.memory_space<vmem>>, %arg5: memref<1x128xf32, #tpu.memory_space<vmem>>, %arg6: memref<8x128xf32, #tpu.memory_space<vmem>>) attributes {dimension_semantics = [#tpu.dimension_semantics<parallel>], iteration_bounds = array<i64: 1>, scalar_prefetch = 0 : i64, scratch_operands = 0 : i64, tpu.core_type = #tpu.core_type<tc>, window_params = [{transform_indices = @transform_0, window_bounds = array<i64: 8, 32>}, {pipeline_mode = #tpu.pipeline_mode<synchronous>, transform_indices = @transform_1, window_bounds = array<i64: 32, 64>}, {pipeline_mode = #tpu.pipeline_mode<synchronous>, transform_indices = @transform_2, window_bounds = array<i64: 1, 64>}, {pipeline_mode = #tpu.pipeline_mode<synchronous>, transform_indices = @transform_3, window_bounds = array<i64: 64, 128>}, {pipeline_mode = #tpu.pipeline_mode<synchronous>, transform_indices = @transform_4, window_bounds = array<i64: 1, 128>}, {transform_indices = @transform_5, window_bounds = array<i64: 8, 128>}]} {
    %c0 = arith.constant 0 : index
    %c0_0 = arith.constant 0 : index
    %0 = vector.load %arg1[%c0, %c0_0] : memref<8x32xf32, #tpu.memory_space<vmem>>, vector<8x32xf32>
    %1 = arith.truncf %0 : vector<8x32xf32> to vector<8x32xbf16>
    %c0_1 = arith.constant 0 : index
    %c0_2 = arith.constant 0 : index
    %2 = vector.load %arg2[%c0_1, %c0_2] : memref<32x64xbf16, #tpu.memory_space<vmem>>, vector<32x64xbf16>
    %cst = arith.constant dense<0.000000e+00> : vector<8x64xf32>
    %3 = tpu.matmul %1, %2, %cst {dimension_numbers = #tpu.dot_dimension_numbers<[1], [0], [0], [1], [0, 0, 1, 1], [], []>} : vector<8x32xbf16>, vector<32x64xbf16>, vector<8x64xf32> -> vector<8x64xf32>
    %c0_3 = arith.constant 0 : index
    %c0_4 = arith.constant 0 : index
    %4 = vector.load %arg3[%c0_3, %c0_4] : memref<1x64xf32, #tpu.memory_space<vmem>>, vector<1x64xf32>
    %5 = vector.broadcast %4 : vector<1x64xf32> to vector<8x64xf32>
    %6 = arith.addf %3, %5 : vector<8x64xf32>
    %cst_5 = arith.constant 0.000000e+00 : f32
    %7 = vector.broadcast %cst_5 : f32 to vector<8x64xf32>
    %8 = arith.maximumf %6, %7 : vector<8x64xf32>
    %9 = arith.truncf %8 : vector<8x64xf32> to vector<8x64xbf16>
    %c0_6 = arith.constant 0 : index
    %c0_7 = arith.constant 0 : index
    %10 = vector.load %arg4[%c0_6, %c0_7] : memref<64x128xbf16, #tpu.memory_space<vmem>>, vector<64x128xbf16>
    %cst_8 = arith.constant dense<0.000000e+00> : vector<8x128xf32>
    %11 = tpu.matmul %9, %10, %cst_8 {dimension_numbers = #tpu.dot_dimension_numbers<[1], [0], [0], [1], [0, 0, 1, 1], [], []>} : vector<8x64xbf16>, vector<64x128xbf16>, vector<8x128xf32> -> vector<8x128xf32>
    %c0_9 = arith.constant 0 : index
    %c0_10 = arith.constant 0 : index
    %12 = vector.load %arg5[%c0_9, %c0_10] : memref<1x128xf32, #tpu.memory_space<vmem>>, vector<1x128xf32>
    %13 = vector.broadcast %12 : vector<1x128xf32> to vector<8x128xf32>
    %14 = arith.addf %11, %13 : vector<8x128xf32>
    %c0_11 = arith.constant 0 : index
    %c0_12 = arith.constant 0 : index
    %15 = vector.load %arg6[%c0_11, %c0_12] : memref<8x128xf32, #tpu.memory_space<vmem>>, vector<8x128xf32>
    tpu.vector_store %arg6[%c0_11, %c0_12], %14 {strides = array<i32>} : memref<8x128xf32, #tpu.memory_space<vmem>>, vector<8x128xf32>,
    return
  }
  func.func @transform_0(%arg0: i32) -> (i32, i32) {
    %c0_i32 = arith.constant 0 : i32
    %c0_i32_0 = arith.constant 0 : i32
    return %arg0, %c0_i32 : i32, i32
  }
  func.func @transform_1(%arg0: i32) -> (i32, i32) {
    %c0_i32 = arith.constant 0 : i32
    %c0_i32_0 = arith.constant 0 : i32
    %c0_i32_1 = arith.constant 0 : i32
    return %c0_i32, %c0_i32_0 : i32, i32
  }
  func.func @transform_2(%arg0: i32) -> (i32, i32) {
    %c0_i32 = arith.constant 0 : i32
    %c0_i32_0 = arith.constant 0 : i32
    %c0_i32_1 = arith.constant 0 : i32
    return %c0_i32, %c0_i32_0 : i32, i32
  }
  func.func @transform_3(%arg0: i32) -> (i32, i32) {
    %c0_i32 = arith.constant 0 : i32
    %c0_i32_0 = arith.constant 0 : i32
    %c0_i32_1 = arith.constant 0 : i32
    return %c0_i32, %c0_i32_0 : i32, i32
  }
  func.func @transform_4(%arg0: i32) -> (i32, i32) {
    %c0_i32 = arith.constant 0 : i32
    %c0_i32_0 = arith.constant 0 : i32
    %c0_i32_1 = arith.constant 0 : i32
    return %c0_i32, %c0_i32_0 : i32, i32
  }
  func.func @transform_5(%arg0: i32) -> (i32, i32) {
    %c0_i32 = arith.constant 0 : i32
    %c0_i32_0 = arith.constant 0 : i32
    return %arg0, %c0_i32 : i32, i32
  }
}

</mosaic_0001>

<llo_original>
// kernel: simplenet_forward.1
$region0: #{simplenet_forward.1}
  #allocation0 [shape = 'u32[]', space=smem, size = 0x4, offset = 0x4, fixed_abs, tag = 'smem constant byte address 0x4 - core index']
  #allocation1 [shape = 'u32[144,128]{1,0:T(1,128)}', space=vmem, size = 0x12000, scoped, tag = 'internal scratch']
  %s0 = inlined_call_operand.hbm [shape: f32[8,32], index: 0, kind: input, shape index: {}]
  %s1 = inlined_call_operand.hbm [shape: bf16[32,64], index: 1, kind: input, shape index: {}]
  %s2 = inlined_call_operand.vmem [shape: f32[1,64], index: 2, kind: input, shape index: {}]
  %s3 = inlined_call_operand.hbm [shape: bf16[64,128], index: 3, kind: input, shape index: {}]
  %s4 = inlined_call_operand.vmem [shape: f32[1,128], index: 4, kind: input, shape index: {}]
  %s5 = inlined_call_operand.hbm [shape: f32[8,128], index: 5, kind: output, shape index: {}]
  %s6 = sld [smem:[#allocation0]]
  $region42: #{simplenet_forward.1} parent=0
    _
  %s8 = ssub.s32 1, %s6
  %s9 = scalar_select 0, %s8, %s6
  $region1: #{simplenet_forward.1} parent=0
    #allocation2 [shape = 'u8[4096]{0}', space=vmem, size = 0x1000, scoped, tag = 'input window, operand 0, single buffered']
    #allocation3 [shape = 's32[1]{0}', space=sflag, size = 0x4, scoped, tag = 'scoped memory for simplenet_forward.1']
    #allocation4 [shape = 's32[1]{0}', space=sflag, size = 0x4, scoped, tag = 'scoped memory for simplenet_forward.1']
    #allocation5 [shape = 'u8[8192]{0}', space=vmem, size = 0x2000, scoped, tag = 'input window, operand 1, single buffered']
    #allocation6 [shape = 's32[1]{0}', space=sflag, size = 0x4, scoped, tag = 'scoped memory for simplenet_forward.1']
    #allocation7 [shape = 'u8[16384]{0}', space=vmem, size = 0x4000, scoped, tag = 'input window, operand 3, single buffered']
    #allocation8 [shape = 'u8[4096]{0}', space=vmem, size = 0x1000, scoped, tag = 'output window, operand 0, single buffered']
    %10 = vsyncpa [#allocation3], 0
    %11 = vsyncpa [#allocation6], 0
    %12 = vsyncpa [#allocation4], 0
    // Predicated region
    $region2: #{simplenet_forward.1} parent=1 // pred_check
      _
    $region3: #{simplenet_forward.1} parent=1 // pred_check_branch
      %14 = sbr.rel (0) target = $region5
    $region4: #{simplenet_forward.1} parent=1 // pred_region
      %s16 = ssub.s32 128, 128
      %17 = vsyncadd [#allocation3], %s16
      %s19 = sshll.u32 [#allocation2], 4
      %s20 = int_to_ptr.vmem [resolvable:$true] %s19
      %22 = dma.hbm_to_vmem [thread:$0]  %s0, 128, %s20, [#allocation3]
    $region5: #{simplenet_forward.1} parent=1 // pred_fallthru
      _
    // Predicated region
    $region6: #{simplenet_forward.1} parent=1 // pred_check
      _
    $region7: #{simplenet_forward.1} parent=1 // pred_check_branch
      %24 = sbr.rel (0) target = $region9
    $region8: #{simplenet_forward.1} parent=1 // pred_region
      %s26 = ssub.s32 256, 256
      %27 = vsyncadd [#allocation6], %s26
      %s28 = sshll.u32 [#allocation5], 4
      %s29 = int_to_ptr.vmem [resolvable:$true] %s28
      %34 = dma.hbm_to_vmem [thread:$0]  %s1, 256, %s29, [#allocation6], 64, 64, 4
    $region9: #{simplenet_forward.1} parent=1 // pred_fallthru
      _
    // Predicated region
    $region10: #{simplenet_forward.1} parent=1 // pred_check
      _
    $region11: #{simplenet_forward.1} parent=1 // pred_check_branch
      %36 = sbr.rel (0) target = $region13
    $region12: #{simplenet_forward.1} parent=1 // pred_region
      _
    $region13: #{simplenet_forward.1} parent=1 // pred_fallthru
      _
    // Predicated region
    $region14: #{simplenet_forward.1} parent=1 // pred_check
      _
    $region15: #{simplenet_forward.1} parent=1 // pred_check_branch
      %38 = sbr.rel (0) target = $region17
    $region16: #{simplenet_forward.1} parent=1 // pred_region
      %s40 = ssub.s32 512, 512
      %41 = vsyncadd [#allocation6], %s40
      %s42 = sshll.u32 [#allocation7], 4
      %s43 = int_to_ptr.vmem [resolvable:$true] %s42
      %48 = dma.hbm_to_vmem [thread:$0]  %s3, 512, %s43, [#allocation6], 64, 64, 4
    $region17: #{simplenet_forward.1} parent=1 // pred_fallthru
      _
    // Predicated region
    $region18: #{simplenet_forward.1} parent=1 // pred_check
      _
    $region19: #{simplenet_forward.1} parent=1 // pred_check_branch
      %50 = sbr.rel (0) target = $region21
    $region20: #{simplenet_forward.1} parent=1 // pred_region
      _
    $region21: #{simplenet_forward.1} parent=1 // pred_fallthru
      _
    // Predicated region
    $region22: #{simplenet_forward.1} parent=1 // pred_check
      _
    $region23: #{simplenet_forward.1} parent=1 // pred_check_branch
      %52 = sbr.rel (0) target = $region25
    $region24: #{simplenet_forward.1} parent=1 // pred_region
      %53 = dma.done [#allocation3], 128
    $region25: #{simplenet_forward.1} parent=1 // pred_fallthru
      _
    // Predicated region
    $region26: #{simplenet_forward.1} parent=1 // pred_check
      _
    $region27: #{simplenet_forward.1} parent=1 // pred_check_branch
      %55 = sbr.rel (0) target = $region29
    $region28: #{simplenet_forward.1} parent=1 // pred_region
      %56 = dma.done [#allocation6], 256
    $region29: #{simplenet_forward.1} parent=1 // pred_fallthru
      _
    // Predicated region
    $region30: #{simplenet_forward.1} parent=1 // pred_check
      _
    $region31: #{simplenet_forward.1} parent=1 // pred_check_branch
      %58 = sbr.rel (0) target = $region33
    $region32: #{simplenet_forward.1} parent=1 // pred_region
      %59 = dma.done [#allocation6], 512
    $region33: #{simplenet_forward.1} parent=1 // pred_fallthru
      _
    %v61 = vld [vmem:[#allocation2] sm:$0xff]
    %v62 = vpack.c.bf16 %v61, %v61
    %v63 = vld [vmem:[#allocation5] sm:$0xf]
    %v64 = vld [vmem:[#allocation5 + $0x4] sm:$0xf]
    %v65 = vld [vmem:[#allocation5 + $0x8] sm:$0xf]
    %v66 = vld [vmem:[#allocation5 + $0xc] sm:$0xf]
    %v67 = vld [vmem:[%s2] sm:$0x1]
    %v69 = vlaneseq
    %v70 = vshrl.u32 %v69, 7
    %v71 = vsub.s32 0, %v70
    %v72 = vrot.slane %v67, %v71
    %v78 = vunpack.c.l.b16 %v63
    %v79 = vunpack.c.l.b16 %v64
    %v80 = vunpack.c.l.b16 %v65
    %v81 = vunpack.c.l.b16 %v66
    %v82 = vpack.c.b16 %v79, %v78
    %v83 = vpack.c.b16 %v81, %v80
    %vm86 = vcmask 261120
    %v88 = vsel %vm86, %v62, 0
    %90 = vmatprep.subr.bf16.mxu0 0
    %91 = vmatpush1.bf16.msra.mxu0 %v82
    %92 = vmatprep.subr.bf16.mxu0 0
    %93 = vmatpush1.bf16.msra.mxu0 %v83
    %94 = vmatprep.subr.bf16.mxu0 0
    %95 = vmatpush1.bf16.msra.mxu0 0
    %96 = vmatprep.subr.bf16.mxu0 0
    %97 = vmatpush1.bf16.msra.mxu0 0
    %98 = vmatprep.subr.bf16.mxu0 0
    %99 = vmatpush1.bf16.msra.mxu0 0
    %100 = vmatprep.subr.bf16.mxu0 0
    %101 = vmatpush1.bf16.msra.mxu0 0
    %102 = vmatprep.subr.bf16.mxu0 0
    %103 = vmatpush1.bf16.msra.mxu0 0
    %104 = vmatprep.subr.bf16.mxu0 0
    %105 = vmatpush1.bf16.msra.mxu0 0
    %106 = vmatprep.subr.bf16.mxu0 0
    %107 = vmatpush1.bf16.msra.mxu0 0
    %108 = vmatprep.subr.bf16.mxu0 0
    %109 = vmatpush1.bf16.msra.mxu0 0
    %110 = vmatprep.subr.bf16.mxu0 0
    %111 = vmatpush1.bf16.msra.mxu0 0
    %112 = vmatprep.subr.bf16.mxu0 0
    %113 = vmatpush1.bf16.msra.mxu0 0
    %114 = vmatprep.subr.bf16.mxu0 0
    %115 = vmatpush1.bf16.msra.mxu0 0
    %116 = vmatprep.subr.bf16.mxu0 0
    %117 = vmatpush1.bf16.msra.mxu0 0
    %118 = vmatprep.subr.bf16.mxu0 0
    %119 = vmatpush1.bf16.msra.mxu0 0
    %120 = vmatprep.subr.bf16.mxu0 0
    %121 = vmatpush1.bf16.msra.mxu0 0
    %122 = vmatprep.mubr.bf16.mxu0 0
    %123 = vmatmul.mubr.bf16.gmra.mrb[0].mxu0 %v88
    %v124 = vpop.f32.mrb[0].mxu0
    %v125 = vadd.f32 %v72, %v124
    %v126 = vpop.f32.mrb[0].mxu0
    %v127 = vpop.f32.mrb[0].mxu0
    %v128 = vpop.f32.mrb[0].mxu0
    %129 = vdwg.mxu0
    %v130 = vmax.f32 %v125, 0.0
    %v131 = vpack.c.bf16 %v130, %v130
    %v132 = vld [vmem:[#allocation7] sm:$0xf]
    %v133 = vld [vmem:[#allocation7 + $0x4] sm:$0xf]
    %v134 = vld [vmem:[#allocation7 + $0x8] sm:$0xf]
    %v135 = vld [vmem:[#allocation7 + $0xc] sm:$0xf]
    %v136 = vld [vmem:[#allocation7 + $0x10] sm:$0xf]
    %v137 = vld [vmem:[#allocation7 + $0x14] sm:$0xf]
    %v138 = vld [vmem:[#allocation7 + $0x18] sm:$0xf]
    %v139 = vld [vmem:[#allocation7 + $0x1c] sm:$0xf]
    %v140 = vld [vmem:[%s4] sm:$0x1]
    %v142 = vlaneseq
    %v143 = vshrl.u32 %v142, 7
    %v144 = vsub.s32 0, %v143
    %v145 = vrot.slane %v140, %v144
    %v155 = vunpack.c.l.b16 %v132
    %v156 = vunpack.c.l.b16 %v133
    %v157 = vunpack.c.l.b16 %v134
    %v158 = vunpack.c.l.b16 %v135
    %v159 = vunpack.c.l.b16 %v136
    %v160 = vunpack.c.l.b16 %v137
    %v161 = vunpack.c.l.b16 %v138
    %v162 = vunpack.c.l.b16 %v139
    %v163 = vpack.c.b16 %v156, %v155
    %v164 = vpack.c.b16 %v158, %v157
    %v165 = vpack.c.b16 %v160, %v159
    %v166 = vpack.c.b16 %v162, %v161
    %vm171 = vcmask 523264
    %v173 = vsel %vm171, %v131, 0
    %175 = vmatprep.subr.bf16.mxu0 0
    %176 = vmatpush1.bf16.msra.mxu0 %v163
    %177 = vmatprep.subr.bf16.mxu0 0
    %178 = vmatpush1.bf16.msra.mxu0 %v164
    %179 = vmatprep.subr.bf16.mxu0 0
    %180 = vmatpush1.bf16.msra.mxu0 %v165
    %181 = vmatprep.subr.bf16.mxu0 0
    %182 = vmatpush1.bf16.msra.mxu0 %v166
    %183 = vmatprep.subr.bf16.mxu0 0
    %184 = vmatpush1.bf16.msra.mxu0 0
    %185 = vmatprep.subr.bf16.mxu0 0
    %186 = vmatpush1.bf16.msra.mxu0 0
    %187 = vmatprep.subr.bf16.mxu0 0
    %188 = vmatpush1.bf16.msra.mxu0 0
    %189 = vmatprep.subr.bf16.mxu0 0
    %190 = vmatpush1.bf16.msra.mxu0 0
    %191 = vmatprep.subr.bf16.mxu0 0
    %192 = vmatpush1.bf16.msra.mxu0 0
    %193 = vmatprep.subr.bf16.mxu0 0
    %194 = vmatpush1.bf16.msra.mxu0 0
    %195 = vmatprep.subr.bf16.mxu0 0
    %196 = vmatpush1.bf16.msra.mxu0 0
    %197 = vmatprep.subr.bf16.mxu0 0
    %198 = vmatpush1.bf16.msra.mxu0 0
    %199 = vmatprep.subr.bf16.mxu0 0
    %200 = vmatpush1.bf16.msra.mxu0 0
    %201 = vmatprep.subr.bf16.mxu0 0
    %202 = vmatpush1.bf16.msra.mxu0 0
    %203 = vmatprep.subr.bf16.mxu0 0
    %204 = vmatpush1.bf16.msra.mxu0 0
    %205 = vmatprep.subr.bf16.mxu0 0
    %206 = vmatpush1.bf16.msra.mxu0 0
    %207 = vmatprep.mubr.bf16.mxu0 0
    %208 = vmatmul.mubr.bf16.gmra.mrb[0].mxu0 %v173
    %v209 = vpop.f32.mrb[0].mxu0
    %v210 = vadd.f32 %v145, %v209
    %v211 = vpop.f32.mrb[0].mxu0
    %v212 = vpop.f32.mrb[0].mxu0
    %v213 = vpop.f32.mrb[0].mxu0
    %214 = vdwg.mxu0
    %215 = vst [vmem:[#allocation8] sm:$0xff] %v210
    // Predicated region
    $region34: #{simplenet_forward.1} parent=1 // pred_check
      _
    $region35: #{simplenet_forward.1} parent=1 // pred_check_branch
      %217 = sbr.rel (0) target = $region37
    $region36: #{simplenet_forward.1} parent=1 // pred_region
      %s219 = ssub.s32 128, 128
      %220 = vsyncadd [#allocation4], %s219
      %s222 = sshll.u32 [#allocation8], 4
      %s223 = int_to_ptr.vmem [resolvable:$true] %s222
      %225 = dma.vmem_to_hbm [thread:$0]  %s223, 128, %s5, [#allocation4]
    $region37: #{simplenet_forward.1} parent=1 // pred_fallthru
      _
    // Predicated region
    $region38: #{simplenet_forward.1} parent=1 // pred_check
      _
    $region39: #{simplenet_forward.1} parent=1 // pred_check_branch
      %227 = sbr.rel (0) target = $region41
    $region40: #{simplenet_forward.1} parent=1 // pred_region
      %228 = dma.done [#allocation4], 128
    $region41: #{simplenet_forward.1} parent=1 // pred_fallthru
      _
    %229 = vsyncpa [#allocation3], 1
    %230 = vsyncpa [#allocation6], 1
    %231 = vsyncpa [#allocation4], 1

</llo_original>
